<compile_context>
chip_gen: v5e
topology: v5e:2x2
jax: 0.10.0
libtpu: 0.0.40
codegen_flags: <defaults>
</compile_context>

<pallas_src>
import functools
import math

import jax
import jax.numpy as jnp
from jax.experimental import pallas as pl
from jax.experimental.pallas import tpu as pltpu

_LANES = 128
_TARGET_TILE_BYTES = 4 << 20          # ~4 MiB blocks -> <10% per-step overhead on v7x
_VMEM_SLACK = 2 << 20
_DB_AMIN = 1e-10
_DB_SCALE = 10.0 / math.log(10.0)     # 10*log10(x) == _DB_SCALE * ln(x)


# ----------------------------------------------------------------------------
# planning helpers
# ----------------------------------------------------------------------------
def _rup(a, b):
    return -(-a // b) * b


@functools.lru_cache(maxsize=None)
def _vmem_budget_bytes():
    """Generation-aware scoped-VMEM ceiling (~75% of physical per-core VMEM)."""
    cap = 64 << 20                     # conservative default == v7x physical
    try:
        fn = getattr(pltpu, "get_tpu_info", None)
        if fn is not None:
            cap = int(getattr(fn(), "vmem_capacity_bytes", cap) or cap)
    except Exception:
        pass
    return (cap * 3) // 4              # 96 MiB on v5e/v6e (128 MiB), 48 MiB on v7x


def _sublane_quantum(itemsize):
    # sub-32-bit dtypes pack along sublanes: 8 for f32, 16 for bf16, 32 for int8
    return max(8, 32 // int(itemsize))


def _choose_split(sample_dims, itemsize, sub):
    """Pick (G, Q), G = prod(leading sample dims), Q = prod(trailing sample dims),
    minimizing the (sub,128)-padded VMEM tile footprint (tie-break: lane-dense)."""
    m = math.prod(sample_dims) if sample_dims else 1
    best_key, best = None, (1, max(m, 1))
    for j in range(len(sample_dims) + 1):
        g = math.prod(sample_dims[:j]) if j else 1
        q = max(m // max(g, 1), 1)
        key = (_rup(g, sub) * _rup(q, _LANES) * itemsize, -q)
        if best_key is None or key < best_key:
            best_key, best = key, (g, q)
    return best


def _plan(x):
    shape = x.shape
    n = int(shape[0])
    sample_dims = tuple(int(d) for d in shape[1:])
    m = math.prod(sample_dims) if sample_dims else 1
    isz = int(jnp.dtype(x.dtype).itemsize)
    sub = _sublane_quantum(isz)
    g, q = _choose_split(sample_dims, isz, sub)
    budget = _vmem_budget_bytes()
    samp_nat = _rup(g, sub) * _rup(q, _LANES) * isz        # native-dtype VMEM block
    samp_f32 = _rup(g, 8) * _rup(q, _LANES) * 4            # f32 compute temporaries
    single_ok = 4 * samp_nat + 3 * samp_f32 + _VMEM_SLACK <= budget
    return n, m, g, q, isz, sub, budget, samp_nat, samp_f32, single_ok


# ----------------------------------------------------------------------------
# single-pass (whole-sample resident) kernels: 1 HBM read + 1 HBM write
# ----------------------------------------------------------------------------
def _whiten_single_kernel(x_ref, o_ref, *, inv_n, inv_nm1, spb):
    # Whole samples are resident in VMEM -> do the numerically better two-pass
    # mean/var per sample (matches torch.std) at zero extra HBM traffic.
    for s in range(spb):                               # static unrolled loop
        x = x_ref[s].astype(jnp.float32)               # (G, Q)
        mean = jnp.sum(x) * inv_n
        d = x - mean
        var = jnp.sum(d * d) * inv_nm1                 # unbiased (m==1 -> NaN, as torch)
        o_ref[s] = (d * jax.lax.rsqrt(var)).astype(o_ref.dtype)


def _db_single_kernel(x_ref, o_ref, *, top_db, spb):
    for s in range(spb):
        x = x_ref[s].astype(jnp.float32)               # (G, Q)
        x_db = _DB_SCALE * jnp.log(jnp.maximum(x, _DB_AMIN))
        floor = jnp.max(x_db) - top_db
        o_ref[s] = jnp.maximum(x_db, floor).astype(o_ref.dtype)


def _run_single_pass(kernel_fn, kernel_kwargs, x3, samp_nat, samp_f32, budget):
    n, g, q = x3.shape
    per_sample = 4 * samp_nat + 3 * samp_f32           # dbl-buffered in+out + f32 temps
    spb = max(1, min(_TARGET_TILE_BYTES // max(samp_nat, 1),
                     (budget - _VMEM_SLACK) // per_sample))
    if n > 1:
        spb = min(spb, -(-n // 2))                     # >=2 grid steps -> both TCs busy
    spb = int(max(1, min(spb, n, 64)))                 # 64 bounds the unrolled loop
    vmem = int(min(budget, max(per_sample * spb + _VMEM_SLACK, 16 << 20)))
    kernel = functools.partial(kernel_fn, spb=spb, **kernel_kwargs)
    spec = pl.BlockSpec((spb, g, q), lambda i: (i, 0, 0))
    return pl.pallas_call(
        kernel,
        out_shape=jax.ShapeDtypeStruct((n, g, q), x3.dtype),
        grid_spec=pl.GridSpec(grid=(pl.cdiv(n, spb),), in_specs=[spec], out_specs=spec),
        compiler_params=pltpu.CompilerParams(
            dimension_semantics=("parallel",),
            vmem_limit_bytes=vmem),
    )(x3)


# ----------------------------------------------------------------------------
# two-pass tiled kernels (big samples): stats pass + apply pass
# ----------------------------------------------------------------------------
def _two_pass_plan(g, q, sub, isz, budget, force_tile_rows):
    row_nat = _rup(q, _LANES) * isz
    row_f32 = _rup(q, _LANES) * 4
    if force_tile_rows is not None:
        tg = max(sub, _rup(int(force_tile_rows), sub))
    else:
        tg = max(sub, (min(g, _TARGET_TILE_BYTES // max(row_nat, 1)) // sub) * sub)
    tg = min(tg, _rup(g, sub))
    gt = pl.cdiv(g, tg)
    vmem = int(min(budget,
                   max(4 * tg * row_nat + 2 * tg * row_f32 + _VMEM_SLACK, 16 << 20)))
    x_spec = pl.BlockSpec((pl.Squeezed(), tg, q), lambda i, k: (i, k, 0))
    s_spec = pl.BlockSpec((pl.Squeezed(), 1, 1), lambda i, k: (i, 0, 0))
    return tg, gt, vmem, x_spec, s_spec


def _whiten_stats_kernel(x_ref, mean_ref, istd_ref, *, inv_n, inv_nm1,
                         g_valid, tg, mask_rows):
    k = pl.program_id(1)

    @pl.when(k == 0)
    def _():
        mean_ref[...] = jnp.zeros_like(mean_ref)
        istd_ref[...] = jnp.zeros_like(istd_ref)

    x = x_ref[...].astype(jnp.float32)                 # (tg, Q)
    if mask_rows:                                      # static: last row-tile is partial
        row = jax.lax.broadcasted_iota(jnp.int32, x.shape, 0) + k * tg
        x = jnp.where(row < g_valid, x, 0.0)
    mean_ref[...] += jnp.sum(x)                        # accumulate s1 in the output
    istd_ref[...] += jnp.sum(x * x)                    # accumulate s2 in the output

    @pl.when(k == pl.num_programs(1) - 1)
    def _():                                           # in-kernel finalize
        s1 = mean_ref[...]
        s2 = istd_ref[...]
        mu = s1 * inv_n
        var = (s2 - s1 * mu) * inv_nm1                 # unbiased, like torch.std
        mean_ref[...] = mu
        istd_ref[...] = jax.lax.rsqrt(var)


def _whiten_apply_kernel(mean_ref, istd_ref, x_ref, o_ref):
    x = x_ref[...].astype(jnp.float32)
    o_ref[...] = ((x - mean_ref[...]) * istd_ref[...]).astype(o_ref.dtype)


def _db_max_kernel(x_ref, floor_ref, *, top_db, g_valid, tg, mask_rows):
    k = pl.program_id(1)

    @pl.when(k == 0)
    def _():
        floor_ref[...] = jnp.full(floor_ref.shape, -jnp.inf, floor_ref.dtype)

    x = x_ref[...].astype(jnp.float32)
    if mask_rows:
        row = jax.lax.broadcasted_iota(jnp.int32, x.shape, 0) + k * tg
        x = jnp.where(row < g_valid, x, -jnp.inf)
    floor_ref[...] = jnp.maximum(floor_ref[...], jnp.max(x))

    @pl.when(k == pl.num_programs(1) - 1)
    def _():
        # max(x_db) == _DB_SCALE * log(max(max(x), amin))   (log is monotonic)
        floor_ref[...] = (_DB_SCALE * jnp.log(jnp.maximum(floor_ref[...], _DB_AMIN))
                          - top_db)


def _db_apply_kernel(floor_ref, x_ref, o_ref):
    x = x_ref[...].astype(jnp.float32)
    x_db = _DB_SCALE * jnp.log(jnp.maximum(x, _DB_AMIN))
    o_ref[...] = jnp.maximum(x_db, floor_ref[...]).astype(o_ref.dtype)


def _whiten_two_pass(x3, m_valid, sub, isz, budget, force_tile_rows):
    n, g, q = x3.shape
    tg, gt, vmem, x_spec, s_spec = _two_pass_plan(g, q, sub, isz, budget, force_tile_rows)
    stats_kernel = functools.partial(
        _whiten_stats_kernel,
        inv_n=1.0 / float(m_valid),
        inv_nm1=1.0 / float(max(m_valid - 1, 1)),
        g_valid=g, tg=tg, mask_rows=(g % tg != 0))
    mean, inv_std = pl.pallas_call(
        stats_kernel,
        out_shape=(jax.ShapeDtypeStruct((n, 1, 1), jnp.float32),
                   jax.ShapeDtypeStruct((n, 1, 1), jnp.float32)),
        grid_spec=pl.GridSpec(grid=(n, gt), in_specs=[x_spec],
                              out_specs=(s_spec, s_spec)),
        compiler_params=pltpu.CompilerParams(
            dimension_semantics=("parallel", "arbitrary"),
            vmem_limit_bytes=vmem),
    )(x3)
    return pl.pallas_call(
        _whiten_apply_kernel,
        out_shape=jax.ShapeDtypeStruct(x3.shape, x3.dtype),
        grid_spec=pl.GridSpec(grid=(n, gt), in_specs=[s_spec, s_spec, x_spec],
                              out_specs=x_spec),
        compiler_params=pltpu.CompilerParams(
            dimension_semantics=("parallel", "parallel"),
            vmem_limit_bytes=vmem),
    )(mean, inv_std, x3)


def _db_two_pass(x3, top_db, sub, isz, budget, force_tile_rows):
    n, g, q = x3.shape
    tg, gt, vmem, x_spec, s_spec = _two_pass_plan(g, q, sub, isz, budget, force_tile_rows)
    max_kernel = functools.partial(_db_max_kernel, top_db=top_db,
                                   g_valid=g, tg=tg, mask_rows=(g % tg != 0))
    floor = pl.pallas_call(
        max_kernel,
        out_shape=jax.ShapeDtypeStruct((n, 1, 1), jnp.float32),
        grid_spec=pl.GridSpec(grid=(n, gt), in_specs=[x_spec], out_specs=s_spec),
        compiler_params=pltpu.CompilerParams(
            dimension_semantics=("parallel", "arbitrary"),
            vmem_limit_bytes=vmem),
    )(x3)
    return pl.pallas_call(
        _db_apply_kernel,
        out_shape=jax.ShapeDtypeStruct(x3.shape, x3.dtype),
        grid_spec=pl.GridSpec(grid=(n, gt), in_specs=[s_spec, x_spec], out_specs=x_spec),
        compiler_params=pltpu.CompilerParams(
            dimension_semantics=("parallel", "parallel"),
            vmem_limit_bytes=vmem),
    )(floor, x3)


# ----------------------------------------------------------------------------
# jitted entry points
# ----------------------------------------------------------------------------
@functools.partial(jax.jit, static_argnames=("_force_two_pass", "_force_tile_rows"))
def spec_norm_whiten(x, *, _force_two_pass=False, _force_tile_rows=None):
    """Per-sample z-transform over all non-batch dims (torch mean / unbiased std)."""
    n, m, g, q, isz, sub, budget, samp_nat, samp_f32, single_ok = _plan(x)
    if m <= 0:
        return x
    x3 = x.reshape(n, g, q)                  # copy-free regrouping, no pad / slice
    if single_ok and not _force_two_pass:
        kwargs = dict(inv_n=1.0 / float(m), inv_nm1=1.0 / float(max(m - 1, 1)))
        y3 = _run_single_pass(_whiten_single_kernel, kwargs, x3,
                              samp_nat, samp_f32, budget)
    else:
        y3 = _whiten_two_pass(x3, m, sub, isz, budget, _force_tile_rows)
    return y3.reshape(x.shape)


@functools.partial(jax.jit,
                   static_argnames=("top_db", "_force_two_pass", "_force_tile_rows"))
def spec_norm_db(x, top_db=80.0, *, _force_two_pass=False, _force_tile_rows=None):
    """AmplitudeToDB(stype='power', top_db) with ref_value == 1 (offset term == 0)."""
    n, m, g, q, isz, sub, budget, samp_nat, samp_f32, single_ok = _plan(x)
    if m <= 0:
        return x
    x3 = x.reshape(n, g, q)
    top_db = float(top_db)
    if single_ok and not _force_two_pass:
        y3 = _run_single_pass(_db_single_kernel, dict(top_db=top_db), x3,
                              samp_nat, samp_f32, budget)
    else:
        y3 = _db_two_pass(x3, top_db, sub, isz, budget, _force_tile_rows)
    return y3.reshape(x.shape)


def spec_normalization(x, norm_type, top_db=80.0):
    """Mirrors SpecNormalization.forward."""
    if norm_type == 'db':
        return spec_norm_db(x, top_db=(float('inf') if top_db is None else float(top_db)))
    if norm_type == 'whiten':
        return spec_norm_whiten(x)
    return x  # identity path, no kernel needed


# ----------------------------------------------------------------------------
# Pure-JAX references
# ----------------------------------------------------------------------------
def _whiten_ref(x):
    xf = x.astype(jnp.float32)
    axes = tuple(range(1, x.ndim))
    mean = jnp.mean(xf, axis=axes, keepdims=True)
    nm1 = max(math.prod(x.shape[1:]) - 1, 1)
    var = jnp.sum((xf - mean) ** 2, axis=axes, keepdims=True) / nm1
    return (xf - mean) / jnp.sqrt(var)


def _db_ref(x, top_db=80.0):
    xf = x.astype(jnp.float32)
    axes = tuple(range(1, x.ndim))
    x_db = 10.0 * jnp.log10(jnp.maximum(xf, 1e-10))
    # ref_value == 1.0 -> the "- 10*log10(max(amin, ref))" term is exactly 0
    floor = jnp.max(x_db, axis=axes, keepdims=True) - top_db
    return jnp.maximum(x_db, floor)


if __name__ == "__main__":
    key = jax.random.PRNGKey(0)
    k1, k2, k3 = jax.random.split(key, 3)

    # Small spectrogram-like input (batch=2, channels=4, freq=16, time=16),
    # strictly positive (power spectrogram).  Single-pass path.
    x = jax.random.uniform(k1, (2, 4, 16, 16), dtype=jnp.float32,
                           minval=1e-6, maxval=5.0)
    y_whiten = spec_normalization(x, 'whiten')
    y_db = spec_normalization(x, 'db', top_db=80.0)
    y_id = spec_normalization(x, 'none')
    jax.block_until_ready((y_whiten, y_db, y_id))
    assert jnp.allclose(y_whiten, _whiten_ref(x), atol=1e-4, rtol=1e-3)
    assert jnp.allclose(y_db, _db_ref(x, 80.0), atol=1e-4, rtol=1e-3)
    assert jnp.array_equal(y_id, x)

    # Ragged dims (nothing divisible by 8/128): exercises the pad-free layout
    # and masked partial lane stores.
    xr = jax.random.uniform(k2, (2, 3, 10, 50), dtype=jnp.float32,
                            minval=1e-6, maxval=5.0)
    yr_w = spec_norm_whiten(xr)
    yr_d = spec_norm_db(xr, top_db=80.0)
    jax.block_until_ready((yr_w, yr_d))
    assert jnp.allclose(yr_w, _whiten_ref(xr), atol=1e-4, rtol=1e-3)
    assert jnp.allclose(yr_d, _db_ref(xr, 80.0), atol=1e-4, rtol=1e-3)

    # Force the tiled two-pass path with a tile that does NOT divide the rows:
    # exercises row masking, cross-tile accumulation and the in-kernel finalize.
    xl = jax.random.uniform(k3, (2, 1, 64, 512), dtype=jnp.float32,
                            minval=1e-6, maxval=5.0)
    yl_w = spec_norm_whiten(xl, _force_two_pass=True, _force_tile_rows=24)
    yl_d = spec_norm_db(xl, top_db=80.0, _force_two_pass=True, _force_tile_rows=24)
    jax.block_until_ready((yl_w, yl_d))
    assert jnp.allclose(yl_w, _whiten_ref(xl), atol=1e-3, rtol=1e-3)
    assert jnp.allclose(yl_d, _db_ref(xl, 80.0), atol=1e-4, rtol=1e-3)

    # bf16 input exercises the dtype-aware sublane quantum.
    xb = x.astype(jnp.bfloat16)
    yb_w = spec_norm_whiten(xb)
    jax.block_until_ready(yb_w)
    assert jnp.allclose(yb_w.astype(jnp.float32),
                        _whiten_ref(xb.astype(jnp.float32)), atol=5e-2, rtol=5e-2)

    print("KERNEL_OK")
</pallas_src>

<mosaic_0001>
module attributes {stable_mosaic.version = 11 : i64} {
  func.func @_whiten_single_kernel(%arg0: i32, %arg1: memref<1x4x256xf32, #tpu.memory_space<vmem>>, %arg2: memref<1x4x256xf32, #tpu.memory_space<vmem>>) attributes {dimension_semantics = [#tpu.dimension_semantics<parallel>], iteration_bounds = array<i64: 2>, scalar_prefetch = 0 : i64, scratch_operands = 0 : i64, tpu.core_type = #tpu.core_type<tc>, window_params = [{transform_indices = @transform_0, window_bounds = array<i64: 1, 4, 256>}, {transform_indices = @transform_1, window_bounds = array<i64: 1, 4, 256>}]} {
    %c0 = arith.constant 0 : index
    %c0_0 = arith.constant 0 : index
    %c0_1 = arith.constant 0 : index
    %0 = vector.load %arg1[%c0, %c0_0, %c0_1] : memref<1x4x256xf32, #tpu.memory_space<vmem>>, vector<1x4x256xf32>
    %1 = vector.shape_cast %0 : vector<1x4x256xf32> to vector<4x256xf32>
    %2 = vector.shape_cast %1 : vector<4x256xf32> to vector<1x4x256xf32>
    %cst = arith.constant dense<0.000000e+00> : vector<1xf32>
    %3 = vector.multi_reduction <add>, %2, %cst [1, 2] : vector<1x4x256xf32> to vector<1xf32>
    %4 = vector.shape_cast %3 : vector<1xf32> to vector<1x1x1xf32>
    %5 = vector.extract %4[0, 0, 0] : f32 from vector<1x1x1xf32>
    %cst_2 = arith.constant 9.765625E-4 : f32
    %6 = arith.mulf %5, %cst_2 : f32
    %7 = vector.broadcast %6 : f32 to vector<4x256xf32>
    %8 = arith.subf %1, %7 : vector<4x256xf32>
    %9 = arith.mulf %8, %8 : vector<4x256xf32>
    %10 = vector.shape_cast %9 : vector<4x256xf32> to vector<1x4x256xf32>
    %cst_3 = arith.constant dense<0.000000e+00> : vector<1xf32>
    %11 = vector.multi_reduction <add>, %10, %cst_3 [1, 2] : vector<1x4x256xf32> to vector<1xf32>
    %12 = vector.shape_cast %11 : vector<1xf32> to vector<1x1x1xf32>
    %13 = vector.extract %12[0, 0, 0] : f32 from vector<1x1x1xf32>
    %cst_4 = arith.constant 9.77517105E-4 : f32
    %14 = arith.mulf %13, %cst_4 : f32
    %15 = math.rsqrt %14 : f32
    %16 = vector.broadcast %15 : f32 to vector<4x256xf32>
    %17 = arith.mulf %8, %16 : vector<4x256xf32>
    %c0_5 = arith.constant 0 : index
    %c0_6 = arith.constant 0 : index
    %c0_7 = arith.constant 0 : index
    %18 = vector.load %arg2[%c0_5, %c0_6, %c0_7] : memref<1x4x256xf32, #tpu.memory_space<vmem>>, vector<1x4x256xf32>
    %19 = vector.shape_cast %18 : vector<1x4x256xf32> to vector<4x256xf32>
    %20 = vector.shape_cast %17 : vector<4x256xf32> to vector<1x4x256xf32>
    tpu.vector_store %arg2[%c0_5, %c0_6, %c0_7], %20 {strides = array<i32>} : memref<1x4x256xf32, #tpu.memory_space<vmem>>, vector<1x4x256xf32>,
    return
  }
  func.func @transform_0(%arg0: i32) -> (i32, i32, i32) {
    %c0_i32 = arith.constant 0 : i32
    %c0_i32_0 = arith.constant 0 : i32
    %c0_i32_1 = arith.constant 0 : i32
    return %arg0, %c0_i32, %c0_i32_0 : i32, i32, i32
  }
  func.func @transform_1(%arg0: i32) -> (i32, i32, i32) {
    %c0_i32 = arith.constant 0 : i32
    %c0_i32_0 = arith.constant 0 : i32
    %c0_i32_1 = arith.constant 0 : i32
    return %arg0, %c0_i32, %c0_i32_0 : i32, i32, i32
  }
}

</mosaic_0001>

<llo_original>
// kernel: spec_norm_whiten.1
$region0: #{spec_norm_whiten.1}
  #allocation0 [shape = 'u32[]', space=smem, size = 0x4, offset = 0x4, fixed_abs, tag = 'smem constant byte address 0x4 - core index']
  #allocation1 [shape = 'u32[72,128]{1,0:T(1,128)}', space=vmem, size = 0x9000, scoped, tag = 'internal scratch']
  %s0 = inlined_call_operand.vmem [shape: f32[2,4,256], index: 0, kind: input, shape index: {}]
  %s1 = inlined_call_operand.vmem [shape: f32[2,4,256], index: 1, kind: output, shape index: {}]
  %s2 = sld [smem:[#allocation0]]
  $region37: #{spec_norm_whiten.1} parent=0
    _
  %s4 = ssub.s32 1, %s2
  %s5 = scalar_select 0, %s4, %s2
  loop: start=0, step=1, limit=4
  $region2: #{spec_norm_whiten.1} parent=0 // loop_pre_header
    _
  $region3: #{spec_norm_whiten.1} parent=0 // loop_header
    %s7 = sphi 0, %s11
    %p8 = scmp.ge.s32.totalorder %s7, 4
    %s17 = sphi 0, %s19
    %s20 = sphi 0, %s17
    %s21 = sphi 0, %s20
    %s37 = sphi 0, %s21
    %s43 = sphi 0, %s45
    %s46 = sphi 0, %s43
    %s47 = sphi 0, %s46
    %s63 = sphi 0, %s47
  $region4: #{spec_norm_whiten.1} parent=0 // loop_header_branch
    %10 = sbr.rel (%p8) target = $region8
  $region5: #{spec_norm_whiten.1} parent=0 // loop_body
    %s12 = ssub.s32 %s7, 1
    %s13 = ssub.s32 %s7, 2
    %s14 = sadd.s32 %s7, 1
    %s15 = ssub.s32 %s7, %s14
    %p16 = scmp.eq.s32.totalorder %s15, 0
    %s18 = sadd.s32 %s17, 1
    %s19 = scalar_select %p16, %s17, %s18
    %p22 = pneg %p16
    %p23 = scmp.eq.s32.totalorder %s7, 1
    %p24 = por %p22, %p23
    %p25 = scmp.ne.s32.totalorder %s17, %s20
    %p26 = scmp.eq.s32.totalorder %s7, 0
    %p27 = por %p25, %p26
    %p28 = scmp.ne.s32.totalorder %s17, %s20
    %p29 = scmp.eq.s32.totalorder %s12, 1
    %p30 = por %p28, %p29
    %p31 = scmp.ne.s32.totalorder %s20, %s21
    %p32 = scmp.eq.s32.totalorder %s12, 0
    %p33 = por %p31, %p32
    %p34 = scmp.ne.s32.totalorder %s20, %s21
    %p35 = scmp.eq.s32.totalorder %s13, 1
    %p36 = por %p34, %p35
    %p38 = scmp.ne.s32.totalorder %s21, %s37
    %p39 = scmp.eq.s32.totalorder %s13, 0
    %p40 = por %p38, %p39
    %s41 = ssub.s32 %s7, %s14
    %p42 = scmp.eq.s32.totalorder %s41, 0
    %s44 = sadd.s32 %s43, 1
    %s45 = scalar_select %p42, %s43, %s44
    %p48 = pneg %p42
    %p49 = scmp.eq.s32.totalorder %s7, 1
    %p50 = por %p48, %p49
    %p51 = scmp.ne.s32.totalorder %s43, %s46
    %p52 = scmp.eq.s32.totalorder %s7, 0
    %p53 = por %p51, %p52
    %p54 = scmp.ne.s32.totalorder %s43, %s46
    %p55 = scmp.eq.s32.totalorder %s12, 1
    %p56 = por %p54, %p55
    %p57 = scmp.ne.s32.totalorder %s46, %s47
    %p58 = scmp.eq.s32.totalorder %s12, 0
    %p59 = por %p57, %p58
    %p60 = scmp.ne.s32.totalorder %s46, %s47
    %p61 = scmp.eq.s32.totalorder %s13, 1
    %p62 = por %p60, %p61
    %p64 = scmp.ne.s32.totalorder %s47, %s63
    %p65 = scmp.eq.s32.totalorder %s13, 0
    %p66 = por %p64, %p65
    %p67 = scmp.le.s32.totalorder 1, %s7
    %p68 = scmp.lt.s32.totalorder %s7, 3
    %p69 = pnand %p67, %p68
    %p70 = pneg %p69
    // Predicated region
    $region9: #{spec_norm_whiten.1} parent=5 // pred_check
      _
    $region10: #{spec_norm_whiten.1} parent=5 // pred_check_branch
      %72 = sbr.rel (%p69) target = $region12
    $region11: #{spec_norm_whiten.1} parent=5 // pred_region
      %s73 = ssub.s32 %s7, 1
    $region12: #{spec_norm_whiten.1} parent=5 // pred_fallthru
      _
    %p74 = scmp.lt.s32.totalorder %s7, 2
    // Predicated region
    $region13: #{spec_norm_whiten.1} parent=5 // pred_check
      %p75 = pneg %p74
    $region14: #{spec_norm_whiten.1} parent=5 // pred_check_branch
      %77 = sbr.rel (%p75) target = $region16
    $region15: #{spec_norm_whiten.1} parent=5 // pred_region
      // Predicated region
      $region17: #{spec_norm_whiten.1} parent=15 // pred_check
        %p78 = pneg %p27
      $region18: #{spec_norm_whiten.1} parent=15 // pred_check_branch
        %80 = sbr.rel (%p78) target = $region20
      $region19: #{spec_norm_whiten.1} parent=15 // pred_region
        %p81 = scmp.lt.s32.totalorder %s7, 1
        %s82 = scalar_select %p81, %s7, 1
        %s83 = smul.addr %s82, 2
        %s84 = smul.addr %s83, 4
        %s85 = scalar_lea.vmem %s0, %s84
      $region20: #{spec_norm_whiten.1} parent=15 // pred_fallthru
        _
    $region16: #{spec_norm_whiten.1} parent=5 // pred_fallthru
      _
    %p86 = scmp.le.s32.totalorder 1, %s7
    %p87 = scmp.lt.s32.totalorder %s7, 3
    %p88 = pnand %p86, %p87
    %p89 = pneg %p88
    // Predicated region
    $region21: #{spec_norm_whiten.1} parent=5 // pred_check
      _
    $region22: #{spec_norm_whiten.1} parent=5 // pred_check_branch
      %91 = sbr.rel (%p88) target = $region24
    $region23: #{spec_norm_whiten.1} parent=5 // pred_region
      %s92 = ssub.s32 %s7, 1
      %p93 = scmp.lt.s32.totalorder %s12, 1
      %s94 = scalar_select %p93, %s12, 1
      %s95 = smul.addr %s94, 2
      %s96 = smul.addr %s95, 4
      %s97 = scalar_lea.vmem %s0, %s96
      %p98 = pneg %p33
      %p99 = pneg %p30
      %p100 = pneg %p59
      %p101 = pneg %p56
      %p102 = scmp.lt.s32.totalorder %s12, 1
      %s103 = scalar_select %p102, %s12, 1
      %s104 = smul.addr %s103, 2
      %s105 = smul.addr %s104, 4
      %s106 = scalar_lea.vmem %s1, %s105
      %p107 = scmp.lt.s32.totalorder %s12, 1
      %s108 = scalar_select %p107, %s12, 1
      %s109 = smul.addr %s108, 2
      %s110 = smul.addr %s109, 4
      %s111 = scalar_lea.vmem %s0, %s110
      %p112 = scmp.lt.s32.totalorder %s12, 1
      %s113 = scalar_select %p112, %s12, 1
      %s114 = smul.addr %s113, 2
      %s115 = smul.addr %s114, 4
      %s116 = scalar_lea.vmem %s1, %s115
      %v117 = vld [vmem:[%s111] sm:$0xff]
      %119 = vst [vmem:[#allocation1] ss:$2 sm:$0xff] %v117
      %v120 = vld.sshfl [vmem:[#allocation1] sm:$0xff pattern:$0x75316420]
      %v121 = vld.sshfl [vmem:[#allocation1 + $0x8] sm:$0xff pattern:$0x75316420]
      %vm124 = vcmask 1043456
      %v125 = vsel %vm124, %v120, 0.0
      %v126 = vsel %vm124, %v121, 0.0
      %v127 = vadd.f32 %v125, %v126
      %128 = vadd.xlane.f32.xlu0 %v127
      %v129 = vpop.xlane.xlu0 %128
      %v130 = vrot.slane %v129, 4
      %v131 = vadd.f32 %v129, %v130
      %v132 = vrot.slane %v131, 2
      %v133 = vadd.f32 %v131, %v132
      %v134 = vrot.slane %v133, 1
      %v135 = vadd.f32 %v133, %v134
      %s136 = vtos %v135
      %s137 = smul.f32 %s136, 0.0009765625
      %v138 = vstv %s137
      %v139 = vsub.f32 %v117, %v138
      %v140 = vmul.f32 %v139, %v139
      %142 = vst [vmem:[#allocation1] ss:$2 sm:$0xff] %v140
      %v143 = vld.sshfl [vmem:[#allocation1] sm:$0xff pattern:$0x75316420]
      %v144 = vld.sshfl [vmem:[#allocation1 + $0x8] sm:$0xff pattern:$0x75316420]
      %v147 = vsel %vm124, %v143, 0.0
      %v148 = vsel %vm124, %v144, 0.0
      %v149 = vadd.f32 %v147, %v148
      %150 = vadd.xlane.f32.xlu0 %v149
      %v151 = vpop.xlane.xlu0 %150
      %v152 = vrot.slane %v151, 4
      %v153 = vadd.f32 %v151, %v152
      %v154 = vrot.slane %v153, 2
      %v155 = vadd.f32 %v153, %v154
      %v156 = vrot.slane %v155, 1
      %v157 = vadd.f32 %v155, %v156
      %s158 = vtos %v157
      %s159 = smul.f32 %s158, 0.0009775171
      %v160 = vstv %s159
      %v161 = vrsqrt.pop %v160
      %v162 = vmul.f32 %v161, %v160
      %v163 = vmul.f32 %v162, %v161
      %v164 = vmul.f32 0.5, %v163
      %v165 = vsub.f32 1.5, %v164
      %v166 = vmul.f32 %v161, %v165
      %vm167 = vweird.f32 %v160
      %vm168 = vweird.f32 %v161
      %vm169 = vmor %vm167, %vm168
      %v170 = vsel %vm169, %v161, %v166
      %s171 = vtos %v170
      %v172 = vstv %s171
      %v173 = vmul.f32 %v139, %v172
      %174 = vst [vmem:[%s116] sm:$0xff] %v173
      %p175 = scmp.lt.s32.totalorder %s12, 1
      %s176 = scalar_select %p175, %s12, 1
      %s177 = smul.addr %s176, 2
      %s178 = smul.addr %s177, 4
      %s179 = scalar_lea.vmem %s1, %s178
      // Predicated region
      $region25: #{spec_norm_whiten.1} parent=23 // pred_check
        %p180 = pneg %p56
      $region26: #{spec_norm_whiten.1} parent=23 // pred_check_branch
        %182 = sbr.rel (%p180) target = $region28
      $region27: #{spec_norm_whiten.1} parent=23 // pred_region
        _
      $region28: #{spec_norm_whiten.1} parent=23 // pred_fallthru
        _
    $region24: #{spec_norm_whiten.1} parent=5 // pred_fallthru
      _
    %p183 = scmp.le.s32.totalorder 2, %s7
    // Predicated region
    $region29: #{spec_norm_whiten.1} parent=5 // pred_check
      %p184 = pneg %p183
    $region30: #{spec_norm_whiten.1} parent=5 // pred_check_branch
      %186 = sbr.rel (%p184) target = $region32
    $region31: #{spec_norm_whiten.1} parent=5 // pred_region
      %s187 = ssub.s32 %s7, 2
      // Predicated region
      $region33: #{spec_norm_whiten.1} parent=31 // pred_check
        %p188 = pneg %p62
      $region34: #{spec_norm_whiten.1} parent=31 // pred_check_branch
        %190 = sbr.rel (%p188) target = $region36
      $region35: #{spec_norm_whiten.1} parent=31 // pred_region
        %p191 = scmp.lt.s32.totalorder %s13, 1
        %s192 = scalar_select %p191, %s13, 1
        %s193 = smul.addr %s192, 2
        %s194 = smul.addr %s193, 4
        %s195 = scalar_lea.vmem %s1, %s194
      $region36: #{spec_norm_whiten.1} parent=31 // pred_fallthru
        _
    $region32: #{spec_norm_whiten.1} parent=5 // pred_fallthru
      _
  $region6: #{spec_norm_whiten.1} parent=0 // loop_footer
    %s11 = sadd.s32 1, %s7
  $region7: #{spec_norm_whiten.1} parent=0 // loop_footer_branch
    %6 = sbr.rel target = $region3
  $region8: #{spec_norm_whiten.1} parent=0 // loop_exit
    _

</llo_original>
